<compile_context>
chip_gen: v6e
topology: v6e:2x2x1
jax: 0.10.0
libtpu: 0.0.40
codegen_flags: <defaults>
</compile_context>

<pallas_src>
import functools

import jax
import jax.numpy as jnp
import numpy as np
from jax.experimental import pallas as pl
from jax.experimental.pallas import tpu as pltpu

H1, H2 = 64, 32
LOG_2PI = float(np.log(2.0 * np.pi))


# --------------------------------------------------------------------------- #
# Kernel
# --------------------------------------------------------------------------- #
def _fused_actor_critic_kernel(
    state_ref, action_ref, stats_ref,
    w1_ref, b1_ref, w2_ref, b2_ref, w3_ref, b3_ref,
    out_ref,
    *, action_dim: int, action_max: float,
):
    x = state_ref[...]                                              # (TB, S)

    # 3 fused (block-diagonal) matmuls: actor occupies the left block of each
    # layer, critic the right block. tanh applies to both hidden layers.
    h = jnp.tanh(jnp.dot(x, w1_ref[...],
                         preferred_element_type=jnp.float32) + b1_ref[...])   # (TB, 128)
    h = jnp.tanh(jnp.dot(h, w2_ref[...],
                         preferred_element_type=jnp.float32) + b2_ref[...])   # (TB, 64)
    z = jnp.dot(h, w3_ref[...],
                preferred_element_type=jnp.float32) + b3_ref[...]             # (TB, A+1)

    mean = jnp.tanh(z[:, :action_dim]) * action_max                 # actor head  (TB, A)
    val = z[:, action_dim:]                                         # critic head (TB, 1)

    # stats = [1/var (A lanes) | -0.5*(A*log(2pi) + logdet) (1 lane)]
    inv_var = stats_ref[:, :action_dim]                             # (1, A)
    logp_const = stats_ref[:, action_dim:]                          # (1, 1)

    diff = action_ref[...] - mean                                   # (TB, A)
    quad = jnp.sum(diff * diff * inv_var, axis=-1, keepdims=True)   # (TB, 1)
    logp = -0.5 * quad + logp_const                                 # (TB, 1)

    # single packed output: [mean | logp | value]
    out_ref[:, :action_dim] = mean
    out_ref[:, action_dim:action_dim + 1] = logp
    out_ref[:, action_dim + 1:] = val


# --------------------------------------------------------------------------- #
# Wrapper
# --------------------------------------------------------------------------- #
def _round_up(x, m):
    return ((x + m - 1) // m) * m


def pack_fused_params(params):
    """Fuse the 12 per-layer (in,out)/(1,out) params into 3 block-diagonal layers."""
    aw1, ab1, aw2, ab2, aw3, ab3, cw1, cb1, cw2, cb2, cw3, cb3 = params
    A = aw3.shape[1]
    w1 = jnp.concatenate([aw1, cw1], axis=1)                        # (S, 128)
    b1 = jnp.concatenate([ab1, cb1], axis=1)                        # (1, 128)
    zero = jnp.zeros((H1, H2), jnp.float32)
    w2 = jnp.block([[aw2, zero], [zero, cw2]])                      # (128, 64)
    b2 = jnp.concatenate([ab2, cb2], axis=1)                        # (1, 64)
    w3 = jnp.block([[aw3, jnp.zeros((H2, 1), jnp.float32)],
                    [jnp.zeros((H2, A), jnp.float32), cw3]])        # (64, A+1)
    b3 = jnp.concatenate([ab3, cb3], axis=1)                        # (1, A+1)
    return w1, b1, w2, b2, w3, b3


def actor_critic_evaluate(state, action, params, action_var, *,
                          action_max: float, tile_b: int = 2048):
    """Returns (action_logprobs (B,), state_value (B,), dist_entropy (B,), action_mean (B,A))."""
    state = state.astype(jnp.float32)
    action = action.astype(jnp.float32)
    B, S = state.shape
    A = action.shape[1]

    w1, b1, w2, b2, w3, b3 = pack_fused_params(params)

    # Hoisted action_var-derived constants.
    inv_var = (1.0 / action_var).reshape(1, A).astype(jnp.float32)
    logdet = jnp.sum(jnp.log(action_var))
    logp_const = (-0.5 * (A * LOG_2PI + logdet)).reshape(1, 1).astype(jnp.float32)
    stats = jnp.concatenate([inv_var, logp_const], axis=-1)         # (1, A+1)
    entropy = 0.5 * A * (1.0 + LOG_2PI) + 0.5 * logdet              # batch-independent scalar

    # Batch tiling: pad B up to a multiple of the (8-aligned) tile.
    tb = min(tile_b, _round_up(B, 8))
    bp = _round_up(B, tb)
    if bp != B:
        pad = bp - B
        state = jnp.pad(state, ((0, pad), (0, 0)))
        action = jnp.pad(action, ((0, pad), (0, 0)))

    row = lambda i: (i, 0)          # batch-tiled arrays
    const = lambda i: (0, 0)        # weights / stats: VMEM-resident across steps

    kernel = functools.partial(_fused_actor_critic_kernel,
                               action_dim=A, action_max=float(action_max))

    packed = pl.pallas_call(
        kernel,
        out_shape=jax.ShapeDtypeStruct((bp, A + 2), jnp.float32),
        grid=(bp // tb,),
        in_specs=[
            pl.BlockSpec((tb, S), row),            # state
            pl.BlockSpec((tb, A), row),            # action
            pl.BlockSpec((1, A + 1), const),       # stats = [inv_var | logp_const]
            pl.BlockSpec((S, 2 * H1), const),      # fused W1
            pl.BlockSpec((1, 2 * H1), const),      # fused b1
            pl.BlockSpec((2 * H1, 2 * H2), const),  # fused W2
            pl.BlockSpec((1, 2 * H2), const),      # fused b2
            pl.BlockSpec((2 * H2, A + 1), const),  # fused W3
            pl.BlockSpec((1, A + 1), const),       # fused b3
        ],
        out_specs=pl.BlockSpec((tb, A + 2), row),  # packed [mean | logp | value]
        compiler_params=pltpu.CompilerParams(
            dimension_semantics=("parallel",)),
    )(state, action, stats, w1, b1, w2, b2, w3, b3)

    mean = packed[:B, :A]
    logp = packed[:B, A]
    val = packed[:B, A + 1]
    ent = jnp.full((B,), entropy, jnp.float32)
    return logp, val, ent, mean


# --------------------------------------------------------------------------- #
# Params / reference
# --------------------------------------------------------------------------- #
def init_params(key, state_dim, action_dim):
    """Deterministic Linear params stored as (in, out) weights and (1, out) biases."""
    dims = [
        (state_dim, H1), (H1, H2), (H2, action_dim),   # actor
        (state_dim, H1), (H1, H2), (H2, 1),            # critic
    ]
    params = []
    for (din, dout) in dims:
        key, kw, kb = jax.random.split(key, 3)
        bound = 1.0 / np.sqrt(din)                     # PyTorch Linear default init range
        w = jax.random.uniform(kw, (din, dout), jnp.float32, -bound, bound)
        b = jax.random.uniform(kb, (1, dout), jnp.float32, -bound, bound)
        params += [w, b]
    return params


def _reference(state, action, params, action_var, action_max):
    aw1, ab1, aw2, ab2, aw3, ab3, cw1, cb1, cw2, cb2, cw3, cb3 = params
    h = jnp.tanh(state @ aw1 + ab1)
    h = jnp.tanh(h @ aw2 + ab2)
    mean = jnp.tanh(h @ aw3 + ab3) * action_max
    c = jnp.tanh(state @ cw1 + cb1)
    c = jnp.tanh(c @ cw2 + cb2)
    val = (c @ cw3 + cb3)[:, 0]
    A = action.shape[1]
    diff = action - mean
    quad = jnp.sum(diff * diff / action_var[None, :], axis=-1)
    logdet = jnp.sum(jnp.log(action_var))
    logp = -0.5 * (quad + A * LOG_2PI + logdet)
    ent = jnp.full((state.shape[0],), 0.5 * A * (1.0 + LOG_2PI) + 0.5 * logdet)
    return logp, val, ent, mean


# --------------------------------------------------------------------------- #
# Demo / self-check
# --------------------------------------------------------------------------- #
if __name__ == "__main__":
    STATE_DIM, ACTION_DIM = 12, 4
    ACTION_STD, ACTION_MAX = 0.5, 2.0

    key = jax.random.PRNGKey(0)
    k_data, k_params = jax.random.split(key)
    params = init_params(k_params, STATE_DIM, ACTION_DIM)
    action_var = jnp.full((ACTION_DIM,), ACTION_STD * ACTION_STD, jnp.float32)

    for B in (8, 10):   # B=10 exercises the partial-tile padding path
        ks, ka = jax.random.split(jax.random.fold_in(k_data, B))
        state = jax.random.normal(ks, (B, STATE_DIM), jnp.float32)
        action = jax.random.normal(ka, (B, ACTION_DIM), jnp.float32)

        logp, val, ent, mean = jax.block_until_ready(
            actor_critic_evaluate(state, action, params, action_var,
                                  action_max=ACTION_MAX))

        r_logp, r_val, r_ent, r_mean = _reference(state, action, params,
                                                  action_var, ACTION_MAX)
        np.testing.assert_allclose(np.asarray(logp), np.asarray(r_logp), rtol=1e-5, atol=1e-5)
        np.testing.assert_allclose(np.asarray(val), np.asarray(r_val), rtol=1e-5, atol=1e-5)
        np.testing.assert_allclose(np.asarray(ent), np.asarray(r_ent), rtol=1e-5, atol=1e-5)
        np.testing.assert_allclose(np.asarray(mean), np.asarray(r_mean), rtol=1e-5, atol=1e-5)

    print("KERNEL_OK")
</pallas_src>

<mosaic_0001>
module attributes {stable_mosaic.version = 11 : i64} {
  func.func @_fused_actor_critic_kernel(%arg0: i32, %arg1: memref<8x12xf32, #tpu.memory_space<vmem>>, %arg2: memref<8x4xf32, #tpu.memory_space<vmem>>, %arg3: memref<1x5xf32, #tpu.memory_space<vmem>>, %arg4: memref<12x128xf32, #tpu.memory_space<vmem>>, %arg5: memref<1x128xf32, #tpu.memory_space<vmem>>, %arg6: memref<128x64xf32, #tpu.memory_space<vmem>>, %arg7: memref<1x64xf32, #tpu.memory_space<vmem>>, %arg8: memref<64x5xf32, #tpu.memory_space<vmem>>, %arg9: memref<1x5xf32, #tpu.memory_space<vmem>>, %arg10: memref<8x6xf32, #tpu.memory_space<vmem>>) attributes {dimension_semantics = [#tpu.dimension_semantics<parallel>], iteration_bounds = array<i64: 1>, scalar_prefetch = 0 : i64, scratch_operands = 0 : i64, tpu.core_type = #tpu.core_type<tc>, window_params = [{transform_indices = @transform_0, window_bounds = array<i64: 8, 12>}, {transform_indices = @transform_1, window_bounds = array<i64: 8, 4>}, {pipeline_mode = #tpu.pipeline_mode<synchronous>, transform_indices = @transform_2, window_bounds = array<i64: 1, 5>}, {pipeline_mode = #tpu.pipeline_mode<synchronous>, transform_indices = @transform_3, window_bounds = array<i64: 12, 128>}, {pipeline_mode = #tpu.pipeline_mode<synchronous>, transform_indices = @transform_4, window_bounds = array<i64: 1, 128>}, {pipeline_mode = #tpu.pipeline_mode<synchronous>, transform_indices = @transform_5, window_bounds = array<i64: 128, 64>}, {pipeline_mode = #tpu.pipeline_mode<synchronous>, transform_indices = @transform_6, window_bounds = array<i64: 1, 64>}, {pipeline_mode = #tpu.pipeline_mode<synchronous>, transform_indices = @transform_7, window_bounds = array<i64: 64, 5>}, {pipeline_mode = #tpu.pipeline_mode<synchronous>, transform_indices = @transform_8, window_bounds = array<i64: 1, 5>}, {transform_indices = @transform_9, window_bounds = array<i64: 8, 6>}]} {
    %c0 = arith.constant 0 : index
    %c0_0 = arith.constant 0 : index
    %0 = vector.load %arg1[%c0, %c0_0] : memref<8x12xf32, #tpu.memory_space<vmem>>, vector<8x12xf32>
    %c0_1 = arith.constant 0 : index
    %c0_2 = arith.constant 0 : index
    %1 = vector.load %arg4[%c0_1, %c0_2] : memref<12x128xf32, #tpu.memory_space<vmem>>, vector<12x128xf32>
    %cst = arith.constant dense<0.000000e+00> : vector<8x128xf32>
    %2 = tpu.matmul %0, %1, %cst {dimension_numbers = #tpu.dot_dimension_numbers<[1], [0], [0], [1], [0, 0, 1, 1], [], []>} : vector<8x12xf32>, vector<12x128xf32>, vector<8x128xf32> -> vector<8x128xf32>
    %c0_3 = arith.constant 0 : index
    %c0_4 = arith.constant 0 : index
    %3 = vector.load %arg5[%c0_3, %c0_4] : memref<1x128xf32, #tpu.memory_space<vmem>>, vector<1x128xf32>
    %4 = vector.broadcast %3 : vector<1x128xf32> to vector<8x128xf32>
    %5 = arith.addf %2, %4 : vector<8x128xf32>
    %6 = math.tanh %5 : vector<8x128xf32>
    %c0_5 = arith.constant 0 : index
    %c0_6 = arith.constant 0 : index
    %7 = vector.load %arg6[%c0_5, %c0_6] : memref<128x64xf32, #tpu.memory_space<vmem>>, vector<128x64xf32>
    %cst_7 = arith.constant dense<0.000000e+00> : vector<8x64xf32>
    %8 = tpu.matmul %6, %7, %cst_7 {dimension_numbers = #tpu.dot_dimension_numbers<[1], [0], [0], [1], [0, 0, 1, 1], [], []>} : vector<8x128xf32>, vector<128x64xf32>, vector<8x64xf32> -> vector<8x64xf32>
    %c0_8 = arith.constant 0 : index
    %c0_9 = arith.constant 0 : index
    %9 = vector.load %arg7[%c0_8, %c0_9] : memref<1x64xf32, #tpu.memory_space<vmem>>, vector<1x64xf32>
    %10 = vector.broadcast %9 : vector<1x64xf32> to vector<8x64xf32>
    %11 = arith.addf %8, %10 : vector<8x64xf32>
    %12 = math.tanh %11 : vector<8x64xf32>
    %c0_10 = arith.constant 0 : index
    %c0_11 = arith.constant 0 : index
    %13 = vector.load %arg8[%c0_10, %c0_11] : memref<64x5xf32, #tpu.memory_space<vmem>>, vector<64x5xf32>
    %cst_12 = arith.constant dense<0.000000e+00> : vector<8x5xf32>
    %14 = tpu.matmul %12, %13, %cst_12 {dimension_numbers = #tpu.dot_dimension_numbers<[1], [0], [0], [1], [0, 0, 1, 1], [], []>} : vector<8x64xf32>, vector<64x5xf32>, vector<8x5xf32> -> vector<8x5xf32>
    %c0_13 = arith.constant 0 : index
    %c0_14 = arith.constant 0 : index
    %15 = vector.load %arg9[%c0_13, %c0_14] : memref<1x5xf32, #tpu.memory_space<vmem>>, vector<1x5xf32>
    %16 = vector.broadcast %15 : vector<1x5xf32> to vector<8x5xf32>
    %17 = arith.addf %14, %16 : vector<8x5xf32>
    %18 = vector.extract_strided_slice %17 {offsets = [0, 0], sizes = [8, 4], strides = [1, 1]} : vector<8x5xf32> to vector<8x4xf32>
    %19 = math.tanh %18 : vector<8x4xf32>
    %cst_15 = arith.constant 2.000000e+00 : f32
    %20 = vector.broadcast %cst_15 : f32 to vector<8x4xf32>
    %21 = arith.mulf %19, %20 : vector<8x4xf32>
    %22 = vector.extract_strided_slice %17 {offsets = [0, 4], sizes = [8, 1], strides = [1, 1]} : vector<8x5xf32> to vector<8x1xf32>
    %c0_16 = arith.constant 0 : index
    %c0_17 = arith.constant 0 : index
    %23 = vector.load %arg3[%c0_16, %c0_17] : memref<1x5xf32, #tpu.memory_space<vmem>>, vector<1x4xf32>
    %c0_18 = arith.constant 0 : index
    %c4 = arith.constant 4 : index
    %24 = vector.load %arg3[%c0_18, %c4] : memref<1x5xf32, #tpu.memory_space<vmem>>, vector<1x1xf32>
    %c0_19 = arith.constant 0 : index
    %c0_20 = arith.constant 0 : index
    %25 = vector.load %arg2[%c0_19, %c0_20] : memref<8x4xf32, #tpu.memory_space<vmem>>, vector<8x4xf32>
    %26 = arith.subf %25, %21 : vector<8x4xf32>
    %27 = arith.mulf %26, %26 : vector<8x4xf32>
    %28 = vector.broadcast %23 : vector<1x4xf32> to vector<8x4xf32>
    %29 = arith.mulf %27, %28 : vector<8x4xf32>
    %cst_21 = arith.constant dense<0.000000e+00> : vector<8xf32>
    %30 = vector.multi_reduction <add>, %29, %cst_21 [1] : vector<8x4xf32> to vector<8xf32>
    %31 = vector.shape_cast %30 : vector<8xf32> to vector<8x1xf32>
    %cst_22 = arith.constant -5.000000e-01 : f32
    %32 = vector.broadcast %cst_22 : f32 to vector<8x1xf32>
    %33 = arith.mulf %32, %31 : vector<8x1xf32>
    %34 = vector.broadcast %24 : vector<1x1xf32> to vector<8x1xf32>
    %35 = arith.addf %33, %34 : vector<8x1xf32>
    %c0_23 = arith.constant 0 : index
    %c0_24 = arith.constant 0 : index
    %36 = vector.load %arg10[%c0_23, %c0_24] : memref<8x6xf32, #tpu.memory_space<vmem>>, vector<8x4xf32>
    tpu.vector_store %arg10[%c0_23, %c0_24], %21 {strides = array<i32>} : memref<8x6xf32, #tpu.memory_space<vmem>>, vector<8x4xf32>,
    %c0_25 = arith.constant 0 : index
    %c4_26 = arith.constant 4 : index
    %37 = vector.load %arg10[%c0_25, %c4_26] : memref<8x6xf32, #tpu.memory_space<vmem>>, vector<8x1xf32>
    tpu.vector_store %arg10[%c0_25, %c4_26], %35 {strides = array<i32>} : memref<8x6xf32, #tpu.memory_space<vmem>>, vector<8x1xf32>,
    %c0_27 = arith.constant 0 : index
    %c5 = arith.constant 5 : index
    %38 = vector.load %arg10[%c0_27, %c5] : memref<8x6xf32, #tpu.memory_space<vmem>>, vector<8x1xf32>
    tpu.vector_store %arg10[%c0_27, %c5], %22 {strides = array<i32>} : memref<8x6xf32, #tpu.memory_space<vmem>>, vector<8x1xf32>,
    return
  }
  func.func @transform_0(%arg0: i32) -> (i32, i32) {
    %c0_i32 = arith.constant 0 : i32
    %c0_i32_0 = arith.constant 0 : i32
    return %arg0, %c0_i32 : i32, i32
  }
  func.func @transform_1(%arg0: i32) -> (i32, i32) {
    %c0_i32 = arith.constant 0 : i32
    %c0_i32_0 = arith.constant 0 : i32
    return %arg0, %c0_i32 : i32, i32
  }
  func.func @transform_2(%arg0: i32) -> (i32, i32) {
    %c0_i32 = arith.constant 0 : i32
    %c0_i32_0 = arith.constant 0 : i32
    %c0_i32_1 = arith.constant 0 : i32
    return %c0_i32, %c0_i32_0 : i32, i32
  }
  func.func @transform_3(%arg0: i32) -> (i32, i32) {
    %c0_i32 = arith.constant 0 : i32
    %c0_i32_0 = arith.constant 0 : i32
    %c0_i32_1 = arith.constant 0 : i32
    return %c0_i32, %c0_i32_0 : i32, i32
  }
  func.func @transform_4(%arg0: i32) -> (i32, i32) {
    %c0_i32 = arith.constant 0 : i32
    %c0_i32_0 = arith.constant 0 : i32
    %c0_i32_1 = arith.constant 0 : i32
    return %c0_i32, %c0_i32_0 : i32, i32
  }
  func.func @transform_5(%arg0: i32) -> (i32, i32) {
    %c0_i32 = arith.constant 0 : i32
    %c0_i32_0 = arith.constant 0 : i32
    %c0_i32_1 = arith.constant 0 : i32
    return %c0_i32, %c0_i32_0 : i32, i32
  }
  func.func @transform_6(%arg0: i32) -> (i32, i32) {
    %c0_i32 = arith.constant 0 : i32
    %c0_i32_0 = arith.constant 0 : i32
    %c0_i32_1 = arith.constant 0 : i32
    return %c0_i32, %c0_i32_0 : i32, i32
  }
  func.func @transform_7(%arg0: i32) -> (i32, i32) {
    %c0_i32 = arith.constant 0 : i32
    %c0_i32_0 = arith.constant 0 : i32
    %c0_i32_1 = arith.constant 0 : i32
    return %c0_i32, %c0_i32_0 : i32, i32
  }
  func.func @transform_8(%arg0: i32) -> (i32, i32) {
    %c0_i32 = arith.constant 0 : i32
    %c0_i32_0 = arith.constant 0 : i32
    %c0_i32_1 = arith.constant 0 : i32
    return %c0_i32, %c0_i32_0 : i32, i32
  }
  func.func @transform_9(%arg0: i32) -> (i32, i32) {
    %c0_i32 = arith.constant 0 : i32
    %c0_i32_0 = arith.constant 0 : i32
    return %arg0, %c0_i32 : i32, i32
  }
}

</mosaic_0001>

<llo_original>
// kernel: tpu_custom_call.1
$region0: #{tpu_custom_call.1}
  #allocation0 [shape = 'u32[]', space=smem, size = 0x4, offset = 0x4, fixed_abs, tag = 'smem constant byte address 0x4 - core index']
  #allocation1 [shape = 'u32[144,128]{1,0:T(1,128)}', space=vmem, size = 0x12000, scoped, tag = 'internal scratch']
  %s0 = inlined_call_operand.vmem [shape: f32[8,12], index: 0, kind: input, shape index: {}]
  %s1 = inlined_call_operand.vmem [shape: f32[8,4], index: 1, kind: input, shape index: {}]
  %s2 = inlined_call_operand.vmem [shape: f32[1,5], index: 2, kind: input, shape index: {}]
  %s3 = inlined_call_operand.vmem [shape: f32[12,128], index: 3, kind: input, shape index: {}]
  %s4 = inlined_call_operand.vmem [shape: f32[1,128], index: 4, kind: input, shape index: {}]
  %s5 = inlined_call_operand.vmem [shape: f32[128,64], index: 5, kind: input, shape index: {}]
  %s6 = inlined_call_operand.vmem [shape: f32[1,64], index: 6, kind: input, shape index: {}]
  %s7 = inlined_call_operand.vmem [shape: f32[64,5], index: 7, kind: input, shape index: {}]
  %s8 = inlined_call_operand.vmem [shape: f32[1,5], index: 8, kind: input, shape index: {}]
  %s9 = inlined_call_operand.hbm [shape: f32[8,6], index: 9, kind: output, shape index: {}]
  %s10 = sld [smem:[#allocation0]]
  $region46: #{tpu_custom_call.1} parent=0
    _
  %s12 = ssub.s32 1, %s10
  %s13 = scalar_select 0, %s12, %s10
  $region1: #{tpu_custom_call.1} parent=0
    #allocation2 [shape = 'u8[4096]{0}', space=vmem, size = 0x1000, scoped, tag = 'output window, operand 0, single buffered']
    #allocation3 [shape = 's32[1]{0}', space=sflag, size = 0x4, scoped, tag = 'scoped memory for tpu_custom_call.1']
    %14 = vsyncpa [#allocation3], 0
    // Predicated region
    $region2: #{tpu_custom_call.1} parent=1 // pred_check
      _
    $region3: #{tpu_custom_call.1} parent=1 // pred_check_branch
      %16 = sbr.rel (0) target = $region5
    $region4: #{tpu_custom_call.1} parent=1 // pred_region
      _
    $region5: #{tpu_custom_call.1} parent=1 // pred_fallthru
      _
    // Predicated region
    $region6: #{tpu_custom_call.1} parent=1 // pred_check
      _
    $region7: #{tpu_custom_call.1} parent=1 // pred_check_branch
      %18 = sbr.rel (0) target = $region9
    $region8: #{tpu_custom_call.1} parent=1 // pred_region
      _
    $region9: #{tpu_custom_call.1} parent=1 // pred_fallthru
      _
    // Predicated region
    $region10: #{tpu_custom_call.1} parent=1 // pred_check
      _
    $region11: #{tpu_custom_call.1} parent=1 // pred_check_branch
      %20 = sbr.rel (0) target = $region13
    $region12: #{tpu_custom_call.1} parent=1 // pred_region
      _
    $region13: #{tpu_custom_call.1} parent=1 // pred_fallthru
      _
    // Predicated region
    $region14: #{tpu_custom_call.1} parent=1 // pred_check
      _
    $region15: #{tpu_custom_call.1} parent=1 // pred_check_branch
      %22 = sbr.rel (0) target = $region17
    $region16: #{tpu_custom_call.1} parent=1 // pred_region
      _
    $region17: #{tpu_custom_call.1} parent=1 // pred_fallthru
      _
    // Predicated region
    $region18: #{tpu_custom_call.1} parent=1 // pred_check
      _
    $region19: #{tpu_custom_call.1} parent=1 // pred_check_branch
      %24 = sbr.rel (0) target = $region21
    $region20: #{tpu_custom_call.1} parent=1 // pred_region
      _
    $region21: #{tpu_custom_call.1} parent=1 // pred_fallthru
      _
    // Predicated region
    $region22: #{tpu_custom_call.1} parent=1 // pred_check
      _
    $region23: #{tpu_custom_call.1} parent=1 // pred_check_branch
      %26 = sbr.rel (0) target = $region25
    $region24: #{tpu_custom_call.1} parent=1 // pred_region
      _
    $region25: #{tpu_custom_call.1} parent=1 // pred_fallthru
      _
    // Predicated region
    $region26: #{tpu_custom_call.1} parent=1 // pred_check
      _
    $region27: #{tpu_custom_call.1} parent=1 // pred_check_branch
      %28 = sbr.rel (0) target = $region29
    $region28: #{tpu_custom_call.1} parent=1 // pred_region
      _
    $region29: #{tpu_custom_call.1} parent=1 // pred_fallthru
      _
    // Predicated region
    $region30: #{tpu_custom_call.1} parent=1 // pred_check
      _
    $region31: #{tpu_custom_call.1} parent=1 // pred_check_branch
      %30 = sbr.rel (0) target = $region33
    $region32: #{tpu_custom_call.1} parent=1 // pred_region
      _
    $region33: #{tpu_custom_call.1} parent=1 // pred_fallthru
      _
    // Predicated region
    $region34: #{tpu_custom_call.1} parent=1 // pred_check
      _
    $region35: #{tpu_custom_call.1} parent=1 // pred_check_branch
      %32 = sbr.rel (0) target = $region37
    $region36: #{tpu_custom_call.1} parent=1 // pred_region
      _
    $region37: #{tpu_custom_call.1} parent=1 // pred_fallthru
      _
    %v33 = vld [vmem:[%s0] sm:$0xff]
    %v34 = vld [vmem:[%s3] sm:$0xff]
    %v35 = vld [vmem:[%s3 + $0x8] sm:$0xf]
    %v36 = vld [vmem:[%s4] sm:$0x1]
    %v38 = vlaneseq
    %v39 = vshrl.u32 %v38, 7
    %v40 = vsub.s32 0, %v39
    %v41 = vrot.slane %v36, %v40
    %vm43 = vcmask 97280
    %v45 = vsel %vm43, %v33, 0
    %vm47 = vcmask 1043456
    %v49 = vsel %vm47, %v35, 0
    %51 = vmatprep.subr.mxu0 0.0
    %52 = vmatpush1.msra.mxu0 0.0
    %53 = vmatprep.subr.mxu0 0.0
    %54 = vmatpush1.msra.mxu0 0.0
    %55 = vmatprep.subr.mxu0 0.0
    %56 = vmatpush1.msra.mxu0 0.0
    %57 = vmatprep.subr.mxu0 0.0
    %58 = vmatpush1.msra.mxu0 0.0
    %59 = vmatprep.subr.mxu0 0.0
    %60 = vmatpush1.msra.mxu0 0.0
    %61 = vmatprep.subr.mxu0 0.0
    %62 = vmatpush1.msra.mxu0 0.0
    %63 = vmatprep.subr.mxu0 0.0
    %64 = vmatpush1.msra.mxu0 0.0
    %65 = vmatprep.subr.mxu0 0.0
    %66 = vmatpush1.msra.mxu0 0.0
    %67 = vmatprep.subr.mxu0 0.0
    %68 = vmatpush1.msra.mxu0 0.0
    %69 = vmatprep.subr.mxu0 0.0
    %70 = vmatpush1.msra.mxu0 0.0
    %71 = vmatprep.subr.mxu0 0.0
    %72 = vmatpush1.msra.mxu0 0.0
    %73 = vmatprep.subr.mxu0 0.0
    %74 = vmatpush1.msra.mxu0 0.0
    %75 = vmatprep.subr.mxu0 0.0
    %76 = vmatpush1.msra.mxu0 0.0
    %77 = vmatprep.subr.mxu0 0.0
    %78 = vmatpush1.msra.mxu0 0.0
    %79 = vmatprep.subr.mxu0 0.0
    %80 = vmatpush1.msra.mxu0 %v49
    %81 = vmatprep.subr.mxu0 0.0
    %82 = vmatpush1.msra.mxu0 %v34
    %83 = vmatprep.subr.mxu0 0.0
    %84 = vmatpush2.msra.mxu0 0.0
    %85 = vmatprep.subr.mxu0 0.0
    %86 = vmatpush2.msra.mxu0 0.0
    %87 = vmatprep.subr.mxu0 0.0
    %88 = vmatpush2.msra.mxu0 0.0
    %89 = vmatprep.subr.mxu0 0.0
    %90 = vmatpush2.msra.mxu0 0.0
    %91 = vmatprep.subr.mxu0 0.0
    %92 = vmatpush2.msra.mxu0 0.0
    %93 = vmatprep.subr.mxu0 0.0
    %94 = vmatpush2.msra.mxu0 0.0
    %95 = vmatprep.subr.mxu0 0.0
    %96 = vmatpush2.msra.mxu0 0.0
    %97 = vmatprep.subr.mxu0 0.0
    %98 = vmatpush2.msra.mxu0 0.0
    %99 = vmatprep.subr.mxu0 0.0
    %100 = vmatpush2.msra.mxu0 0.0
    %101 = vmatprep.subr.mxu0 0.0
    %102 = vmatpush2.msra.mxu0 0.0
    %103 = vmatprep.subr.mxu0 0.0
    %104 = vmatpush2.msra.mxu0 0.0
    %105 = vmatprep.subr.mxu0 0.0
    %106 = vmatpush2.msra.mxu0 0.0
    %107 = vmatprep.subr.mxu0 0.0
    %108 = vmatpush2.msra.mxu0 0.0
    %109 = vmatprep.subr.mxu0 0.0
    %110 = vmatpush2.msra.mxu0 0.0
    %111 = vmatprep.subr.mxu0 0.0
    %112 = vmatpush2.msra.mxu0 0.0
    %113 = vmatprep.subr.mxu0 0.0
    %114 = vmatpush2.msra.mxu0 0.0
    %115 = vmatprep.mubr.f32.mxu0 0.0
    %116 = vmatmul.mubr.f32.gmra.mxu0 %v45
    %v117 = vpop.f32.mrf.mxu0
    %v118 = vadd.f32 %v41, %v117
    %v119 = vpop.f32.mrf.mxu0
    %120 = vdwg.mxu0
    %v121 = vtanh.pop %v118
    %v122 = vld [vmem:[%s5] sm:$0xff]
    %v123 = vld [vmem:[%s5 + $0x8] sm:$0xff]
    %v124 = vld [vmem:[%s5 + $0x10] sm:$0xff]
    %v125 = vld [vmem:[%s5 + $0x18] sm:$0xff]
    %v126 = vld [vmem:[%s5 + $0x20] sm:$0xff]
    %v127 = vld [vmem:[%s5 + $0x28] sm:$0xff]
    %v128 = vld [vmem:[%s5 + $0x30] sm:$0xff]
    %v129 = vld [vmem:[%s5 + $0x38] sm:$0xff]
    %v130 = vld [vmem:[%s5 + $0x40] sm:$0xff]
    %v131 = vld [vmem:[%s5 + $0x48] sm:$0xff]
    %v132 = vld [vmem:[%s5 + $0x50] sm:$0xff]
    %v133 = vld [vmem:[%s5 + $0x58] sm:$0xff]
    %v134 = vld [vmem:[%s5 + $0x60] sm:$0xff]
    %v135 = vld [vmem:[%s5 + $0x68] sm:$0xff]
    %v136 = vld [vmem:[%s5 + $0x70] sm:$0xff]
    %v137 = vld [vmem:[%s5 + $0x78] sm:$0xff]
    %v138 = vld [vmem:[%s6] sm:$0x1]
    %v140 = vlaneseq
    %v141 = vshrl.u32 %v140, 7
    %v142 = vsub.s32 0, %v141
    %v143 = vrot.slane %v138, %v142
    %145 = vmatprep.subr.mxu0 0.0
    %146 = vmatpush1.msra.mxu0 %v137
    %147 = vmatprep.subr.mxu0 0.0
    %148 = vmatpush1.msra.mxu0 %v136
    %149 = vmatprep.subr.mxu0 0.0
    %150 = vmatpush1.msra.mxu0 %v135
    %151 = vmatprep.subr.mxu0 0.0
    %152 = vmatpush1.msra.mxu0 %v134
    %153 = vmatprep.subr.mxu0 0.0
    %154 = vmatpush1.msra.mxu0 %v133
    %155 = vmatprep.subr.mxu0 0.0
    %156 = vmatpush1.msra.mxu0 %v132
    %157 = vmatprep.subr.mxu0 0.0
    %158 = vmatpush1.msra.mxu0 %v131
    %159 = vmatprep.subr.mxu0 0.0
    %160 = vmatpush1.msra.mxu0 %v130
    %161 = vmatprep.subr.mxu0 0.0
    %162 = vmatpush1.msra.mxu0 %v129
    %163 = vmatprep.subr.mxu0 0.0
    %164 = vmatpush1.msra.mxu0 %v128
    %165 = vmatprep.subr.mxu0 0.0
    %166 = vmatpush1.msra.mxu0 %v127
    %167 = vmatprep.subr.mxu0 0.0
    %168 = vmatpush1.msra.mxu0 %v126
    %169 = vmatprep.subr.mxu0 0.0
    %170 = vmatpush1.msra.mxu0 %v125
    %171 = vmatprep.subr.mxu0 0.0
    %172 = vmatpush1.msra.mxu0 %v124
    %173 = vmatprep.subr.mxu0 0.0
    %174 = vmatpush1.msra.mxu0 %v123
    %175 = vmatprep.subr.mxu0 0.0
    %176 = vmatpush1.msra.mxu0 %v122
    %177 = vmatprep.subr.mxu0 0.0
    %178 = vmatpush2.msra.mxu0 0.0
    %179 = vmatprep.subr.mxu0 0.0
    %180 = vmatpush2.msra.mxu0 0.0
    %181 = vmatprep.subr.mxu0 0.0
    %182 = vmatpush2.msra.mxu0 0.0
    %183 = vmatprep.subr.mxu0 0.0
    %184 = vmatpush2.msra.mxu0 0.0
    %185 = vmatprep.subr.mxu0 0.0
    %186 = vmatpush2.msra.mxu0 0.0
    %187 = vmatprep.subr.mxu0 0.0
    %188 = vmatpush2.msra.mxu0 0.0
    %189 = vmatprep.subr.mxu0 0.0
    %190 = vmatpush2.msra.mxu0 0.0
    %191 = vmatprep.subr.mxu0 0.0
    %192 = vmatpush2.msra.mxu0 0.0
    %193 = vmatprep.subr.mxu0 0.0
    %194 = vmatpush2.msra.mxu0 0.0
    %195 = vmatprep.subr.mxu0 0.0
    %196 = vmatpush2.msra.mxu0 0.0
    %197 = vmatprep.subr.mxu0 0.0
    %198 = vmatpush2.msra.mxu0 0.0
    %199 = vmatprep.subr.mxu0 0.0
    %200 = vmatpush2.msra.mxu0 0.0
    %201 = vmatprep.subr.mxu0 0.0
    %202 = vmatpush2.msra.mxu0 0.0
    %203 = vmatprep.subr.mxu0 0.0
    %204 = vmatpush2.msra.mxu0 0.0
    %205 = vmatprep.subr.mxu0 0.0
    %206 = vmatpush2.msra.mxu0 0.0
    %207 = vmatprep.subr.mxu0 0.0
    %208 = vmatpush2.msra.mxu0 0.0
    %209 = vmatprep.mubr.f32.mxu0 0.0
    %210 = vmatmul.mubr.f32.gmra.mxu0 %v121
    %v211 = vpop.f32.mrf.mxu0
    %v212 = vadd.f32 %v143, %v211
    %v213 = vpop.f32.mrf.mxu0
    %214 = vdwg.mxu0
    %v215 = vtanh.pop %v212
    %v216 = vld [vmem:[%s7] sm:$0xff]
    %v217 = vld [vmem:[%s7 + $0x8] sm:$0xff]
    %v218 = vld [vmem:[%s7 + $0x10] sm:$0xff]
    %v219 = vld [vmem:[%s7 + $0x18] sm:$0xff]
    %v220 = vld [vmem:[%s7 + $0x20] sm:$0xff]
    %v221 = vld [vmem:[%s7 + $0x28] sm:$0xff]
    %v222 = vld [vmem:[%s7 + $0x30] sm:$0xff]
    %v223 = vld [vmem:[%s7 + $0x38] sm:$0xff]
    %v224 = vld [vmem:[%s8] sm:$0x1]
    %v226 = vlaneseq
    %v227 = vshrl.u32 %v226, 7
    %v228 = vsub.s32 0, %v227
    %v229 = vrot.slane %v224, %v228
    %vm231 = vcmask 523264
    %v233 = vsel %vm231, %v215, 0
    %235 = vmatprep.subr.mxu0 0.0
    %236 = vmatpush1.msra.mxu0 0.0
    %237 = vmatprep.subr.mxu0 0.0
    %238 = vmatpush1.msra.mxu0 0.0
    %239 = vmatprep.subr.mxu0 0.0
    %240 = vmatpush1.msra.mxu0 0.0
    %241 = vmatprep.subr.mxu0 0.0
    %242 = vmatpush1.msra.mxu0 0.0
    %243 = vmatprep.subr.mxu0 0.0
    %244 = vmatpush1.msra.mxu0 0.0
    %245 = vmatprep.subr.mxu0 0.0
    %246 = vmatpush1.msra.mxu0 0.0
    %247 = vmatprep.subr.mxu0 0.0
    %248 = vmatpush1.msra.mxu0 0.0
    %249 = vmatprep.subr.mxu0 0.0
    %250 = vmatpush1.msra.mxu0 0.0
    %251 = vmatprep.subr.mxu0 0.0
    %252 = vmatpush1.msra.mxu0 %v223
    %253 = vmatprep.subr.mxu0 0.0
    %254 = vmatpush1.msra.mxu0 %v222
    %255 = vmatprep.subr.mxu0 0.0
    %256 = vmatpush1.msra.mxu0 %v221
    %257 = vmatprep.subr.mxu0 0.0
    %258 = vmatpush1.msra.mxu0 %v220
    %259 = vmatprep.subr.mxu0 0.0
    %260 = vmatpush1.msra.mxu0 %v219
    %261 = vmatprep.subr.mxu0 0.0
    %262 = vmatpush1.msra.mxu0 %v218
    %263 = vmatprep.subr.mxu0 0.0
    %264 = vmatpush1.msra.mxu0 %v217
    %265 = vmatprep.subr.mxu0 0.0
    %266 = vmatpush1.msra.mxu0 %v216
    %267 = vmatprep.subr.mxu0 0.0
    %268 = vmatpush2.msra.mxu0 0.0
    %269 = vmatprep.subr.mxu0 0.0
    %270 = vmatpush2.msra.mxu0 0.0
    %271 = vmatprep.subr.mxu0 0.0
    %272 = vmatpush2.msra.mxu0 0.0
    %273 = vmatprep.subr.mxu0 0.0
    %274 = vmatpush2.msra.mxu0 0.0
    %275 = vmatprep.subr.mxu0 0.0
    %276 = vmatpush2.msra.mxu0 0.0
    %277 = vmatprep.subr.mxu0 0.0
    %278 = vmatpush2.msra.mxu0 0.0
    %279 = vmatprep.subr.mxu0 0.0
    %280 = vmatpush2.msra.mxu0 0.0
    %281 = vmatprep.subr.mxu0 0.0
    %282 = vmatpush2.msra.mxu0 0.0
    %283 = vmatprep.subr.mxu0 0.0
    %284 = vmatpush2.msra.mxu0 0.0
    %285 = vmatprep.subr.mxu0 0.0
    %286 = vmatpush2.msra.mxu0 0.0
    %287 = vmatprep.subr.mxu0 0.0
    %288 = vmatpush2.msra.mxu0 0.0
    %289 = vmatprep.subr.mxu0 0.0
    %290 = vmatpush2.msra.mxu0 0.0
    %291 = vmatprep.subr.mxu0 0.0
    %292 = vmatpush2.msra.mxu0 0.0
    %293 = vmatprep.subr.mxu0 0.0
    %294 = vmatpush2.msra.mxu0 0.0
    %295 = vmatprep.subr.mxu0 0.0
    %296 = vmatpush2.msra.mxu0 0.0
    %297 = vmatprep.subr.mxu0 0.0
    %298 = vmatpush2.msra.mxu0 0.0
    %299 = vmatprep.mubr.f32.mxu0 0.0
    %300 = vmatmul.mubr.f32.gmra.mxu0 %v233
    %v301 = vpop.f32.mrf.mxu0
    %v302 = vadd.f32 %v229, %v301
    %v303 = vpop.f32.mrf.mxu0
    %304 = vdwg.mxu0
    %v305 = vtanh.pop %v302
    %v306 = vmul.f32 %v305, 2.0
    %v307 = vld [vmem:[%s2] sm:$0x1]
    %v308 = vld [vmem:[%s1] sm:$0xff]
    %v309 = vsub.f32 %v308, %v306
    %v310 = vmul.f32 %v309, %v309
    %v312 = vlaneseq
    %v313 = vshrl.u32 %v312, 7
    %v314 = vsub.s32 0, %v313
    %v315 = vrot.slane %v307, %v314
    %v317 = vmul.f32 %v310, %v315
    %vm318 = vcmask 31744
    %v319 = vsel %vm318, %v317, 0.0
    %320 = vadd.xlane.f32.xlu0 %v319
    %v321 = vpop.xlane.xlu0 %320
    %v322 = vmul.f32 %v321, -0.5
    %v323 = vadd.f32 %v322, %v315
    %324 = vst.msk [vmem:[#allocation2] sm:$0xff] %vm318, %v306
    %vm325 = vcmask 39968
    %326 = vst.msk [vmem:[#allocation2] sm:$0xff] %vm325, %v323
    %328 = vrot.lane.b32.xlu0 %v302, 1
    %v329 = vpop.permute.xlu0 %328
    %vm331 = vcmask 48168
    %332 = vst.msk [vmem:[#allocation2] sm:$0xff] %vm331, %v329
    // Predicated region
    $region38: #{tpu_custom_call.1} parent=1 // pred_check
      _
    $region39: #{tpu_custom_call.1} parent=1 // pred_check_branch
      %334 = sbr.rel (0) target = $region41
    $region40: #{tpu_custom_call.1} parent=1 // pred_region
      %s336 = ssub.s32 128, 128
      %337 = vsyncadd [#allocation3], %s336
      %s339 = sshll.u32 [#allocation2], 4
      %s340 = int_to_ptr.vmem [resolvable:$true] %s339
      %342 = dma.vmem_to_hbm [thread:$0]  %s340, 128, %s9, [#allocation3]
    $region41: #{tpu_custom_call.1} parent=1 // pred_fallthru
      _
    // Predicated region
    $region42: #{tpu_custom_call.1} parent=1 // pred_check
      _
    $region43: #{tpu_custom_call.1} parent=1 // pred_check_branch
      %344 = sbr.rel (0) target = $region45
    $region44: #{tpu_custom_call.1} parent=1 // pred_region
      %345 = dma.done [#allocation3], 128
    $region45: #{tpu_custom_call.1} parent=1 // pred_fallthru
      _
    %346 = vsyncpa [#allocation3], 1

</llo_original>
